<compile_context>
chip_gen: v7x
topology: tpu7x:2x2x1
jax: 0.10.0
libtpu: 0.0.40
codegen_flags: <defaults>
</compile_context>

<pallas_src>
import functools

import jax
import jax.numpy as jnp
from jax.experimental import pallas as pl
from jax.experimental.pallas import tpu as pltpu


# ---------------------------------------------------------------------------
# In-kernel helpers.
# ---------------------------------------------------------------------------
def _roll(x, shift, axis):
    """Static circular roll (non-negative shift for maximum lowering safety)."""
    return pltpu.roll(x, shift % x.shape[axis], axis)


def _sobel_boundary(x, row0, rowL, col0, colL, region):
    """Zero-padded 3x3 Sobel magnitude + min/max normalization over `region`.

    Each ±1 shift is an XLU roll; the single wrapped-around row/col is
    re-zeroed with a precomputed edge mask (VPU select), which makes the
    result identical to conv2d(padding=1) with zero padding.  min/max are
    taken over the un-padded image region only.
    """
    x_dn = jnp.where(row0, 0.0, _roll(x, 1, 0))        # x[i-1, j]
    x_up = jnp.where(rowL, 0.0, _roll(x, -1, 0))       # x[i+1, j]
    sr = x_dn + 2.0 * x + x_up                         # [1,2,1] along rows
    gx = (jnp.where(colL, 0.0, _roll(sr, -1, 1))       # sr[i, j+1]
          - jnp.where(col0, 0.0, _roll(sr, 1, 1)))     # sr[i, j-1]

    x_rt = jnp.where(col0, 0.0, _roll(x, 1, 1))        # x[i, j-1]
    x_lt = jnp.where(colL, 0.0, _roll(x, -1, 1))       # x[i, j+1]
    sc = x_rt + 2.0 * x + x_lt                         # [1,2,1] along cols
    gy = (jnp.where(rowL, 0.0, _roll(sc, -1, 0))       # sc[i+1, j]
          - jnp.where(row0, 0.0, _roll(sc, 1, 0)))     # sc[i-1, j]

    g = jnp.sqrt(gx * gx + gy * gy)
    gmin = jnp.min(jnp.where(region, g, jnp.inf))
    gmax = jnp.max(jnp.where(region, g, 0.0))          # g >= 0, so 0 never wins
    inv_range = 1.0 / (gmax - gmin + 1e-6)             # one scalar divide
    return (g - gmin) * inv_range


# ---------------------------------------------------------------------------
# Pallas kernel: one grid step == one class.
# ---------------------------------------------------------------------------
def _boundary_loss_kernel(n_valid_ref, pred_ref, lse_ref, target_ref, out_ref,
                          *, ignore_index, valid_h, valid_w):
    c = pl.program_id(0)

    logits = pred_ref[0].astype(jnp.float32)   # (Hp, Wp) class-c logits (cast after load)
    lse = lse_ref[...]                         # (Hp, Wp) f32 logsumexp over classes (hoisted)
    target = target_ref[...]                   # (Hp, Wp) i32 labels (padded w/ ignore_index)
    Hp, Wp = target.shape

    # Edge / region masks (built once per invocation; cheap VPU compares).
    ri = jax.lax.broadcasted_iota(jnp.int32, (Hp, Wp), 0)
    ci = jax.lax.broadcasted_iota(jnp.int32, (Hp, Wp), 1)
    row0, rowL = ri == 0, ri == Hp - 1
    col0, colL = ci == 0, ci == Wp - 1
    region = (ri < valid_h) & (ci < valid_w)   # the un-padded image

    # Softmax slice for class c; zero outside the real image so the Sobel at
    # real edge pixels sees the same zeros as conv2d's zero padding.
    sm_c = jnp.where(region, jnp.exp(logits - lse), 0.0)
    tgt_c = jnp.where(region & (target == c), 1.0, 0.0)

    pb = _sobel_boundary(sm_c, row0, rowL, col0, colL, region)
    tb = _sobel_boundary(tgt_c, row0, rowL, col0, colL, region)

    # binary_cross_entropy (PyTorch clamps log outputs at -100), masked mean.
    log_p = jnp.maximum(jnp.log(pb), -100.0)
    log_1mp = jnp.maximum(jnp.log(1.0 - pb), -100.0)
    bce = -(tb * log_p + (1.0 - tb) * log_1mp)

    valid = region & (target != ignore_index)
    inv_n = 1.0 / jnp.maximum(n_valid_ref[0], 1).astype(jnp.float32)  # scalar, prefetched
    partial = jnp.sum(jnp.where(valid, bce, 0.0)) * inv_n

    # Lane-dense per-class partial (unmasked full-block store).
    out_ref[...] = jnp.full((8, 128), partial, jnp.float32)


# ---------------------------------------------------------------------------
# Wrapper
# ---------------------------------------------------------------------------
def _vmem_capacity_bytes(default=64 << 20):
    try:
        cap = getattr(pltpu.get_tpu_info(), "vmem_capacity_bytes", None)
        return int(cap) if cap else default
    except Exception:
        return default


def boundary_loss(pred, target, num_classes, ignore_index=255):
    """pred: (1, C, H, W) float logits; target: (1, H, W) int labels -> scalar loss."""
    N, C, H, W = pred.shape
    assert N == 1, "BoundaryLoss conv only supports batch size 1 (as in PyTorch)"
    assert C == num_classes

    # Stream pred in its native dtype if it is bf16/f32 (cast to f32 in-kernel).
    p = pred[0] if pred.dtype in (jnp.bfloat16, jnp.float32) else pred[0].astype(jnp.float32)
    t = target.reshape(H, W).astype(jnp.int32)

    # Pad to lane/sublane-aligned plane; padded pixels are ignore_index and are
    # excluded from softmax / min-max / BCE inside the kernel.
    Hp = max(8, ((H + 7) // 8) * 8)
    Wp = max(128, ((W + 127) // 128) * 128)
    if (Hp, Wp) != (H, W):
        p = jnp.pad(p, ((0, 0), (0, Hp - H), (0, Wp - W)))
        t = jnp.pad(t, ((0, Hp - H), (0, Wp - W)), constant_values=ignore_index)

    # Hoisted cross-class coupling: softmax denominator (one cheap XLA reduce).
    pf = p.astype(jnp.float32)
    m = jnp.max(pf, axis=0)
    lse = m + jnp.log(jnp.sum(jnp.exp(pf - m[None]), axis=0))        # (Hp, Wp) f32

    # Hoisted ignore-mask normalizer (one reduce total instead of one per class).
    n_valid = jnp.sum((t != ignore_index).astype(jnp.int32)).astype(jnp.int32).reshape(1)

    kernel = functools.partial(_boundary_loss_kernel, ignore_index=ignore_index,
                               valid_h=H, valid_w=W)

    # Generation-aware VMEM budget (v5e/v6e: 128 MiB, v7x: 64 MiB per TC).
    plane = Hp * Wp * 4
    pred_plane = Hp * Wp * p.dtype.itemsize
    need = 20 * plane + 2 * pred_plane + (2 << 20)
    cap = _vmem_capacity_bytes()
    usable = max(cap - (28 << 20), cap // 2)
    vmem_limit = int(min(max(need, 32 << 20), usable))
    # TODO(synk): if need > usable (very large H,W on v7x's 64 MiB/TC), add H-strip
    # spatial tiling with a two-pass min/max instead of one resident plane.
    # TODO(synk): mark lse/target BlockSpecs pipeline_mode=pl.Buffered(1) once
    # single-buffered pipeline_mode is verified on the deployed jax build.

    partials = pl.pallas_call(
        kernel,
        out_shape=jax.ShapeDtypeStruct((num_classes * 8, 128), jnp.float32),
        grid_spec=pltpu.PrefetchScalarGridSpec(
            num_scalar_prefetch=1,                                   # n_valid -> SMEM
            grid=(num_classes,),
            in_specs=[
                pl.BlockSpec((1, Hp, Wp), lambda c, n: (c, 0, 0)),   # class-c logits (streamed)
                pl.BlockSpec((Hp, Wp), lambda c, n: (0, 0)),         # logsumexp (resident)
                pl.BlockSpec((Hp, Wp), lambda c, n: (0, 0)),         # target labels (resident)
            ],
            out_specs=pl.BlockSpec((8, 128), lambda c, n: (c, 0)),   # lane-dense per-class block
        ),
        compiler_params=pltpu.CompilerParams(
            dimension_semantics=("parallel",),                       # classes split over TCs
            vmem_limit_bytes=vmem_limit,
        ),
    )(n_valid, p, lse, t)

    per_class = partials.reshape(num_classes, 8, 128)[:, 0, 0]
    return jnp.sum(per_class) / jnp.float32(num_classes)


# ---------------------------------------------------------------------------
# Pure-JAX reference (mirrors the PyTorch module) for a sanity check.
# ---------------------------------------------------------------------------
def _reference_boundary_loss(pred, target, num_classes, ignore_index=255):
    sobel_x = jnp.array([[-1., 0., 1.], [-2., 0., 2.], [-1., 0., 1.]],
                        jnp.float32).reshape(1, 1, 3, 3)
    sobel_y = jnp.array([[-1., -2., -1.], [0., 0., 0.], [1., 2., 1.]],
                        jnp.float32).reshape(1, 1, 3, 3)
    p = jax.nn.softmax(pred.astype(jnp.float32), axis=1)
    mask = target != ignore_index

    def get_boundary(x):                      # x: (1, H, W)
        xi = x[None]                          # (1, 1, H, W)
        gx = jax.lax.conv_general_dilated(xi, sobel_x, (1, 1),
                                          [(1, 1), (1, 1)],
                                          dimension_numbers=('NCHW', 'OIHW', 'NCHW'))
        gy = jax.lax.conv_general_dilated(xi, sobel_y, (1, 1),
                                          [(1, 1), (1, 1)],
                                          dimension_numbers=('NCHW', 'OIHW', 'NCHW'))
        g = jnp.sqrt(gx ** 2 + gy ** 2)
        g = (g - g.min()) / (g.max() - g.min() + 1e-6)
        return g[0]                           # (1, H, W)

    total = 0.0
    for i in range(num_classes):
        pb = get_boundary(p[:, i])[mask]
        tb = get_boundary((target == i).astype(jnp.float32))[mask]
        log_p = jnp.clip(jnp.log(pb), -100.0, None)
        log_1mp = jnp.clip(jnp.log(1.0 - pb), -100.0, None)
        total = total + jnp.mean(-(tb * log_p + (1.0 - tb) * log_1mp))
    return total / num_classes


if __name__ == "__main__":
    key = jax.random.PRNGKey(0)
    k1, k2 = jax.random.split(key)

    num_classes = 4
    B, H, W = 1, 16, 16
    pred = jax.random.normal(k1, (B, num_classes, H, W), jnp.float32)
    target = jax.random.randint(k2, (B, H, W), 0, num_classes).astype(jnp.int32)
    # sprinkle some ignore_index pixels
    target = target.at[0, :2, :3].set(255)

    loss = boundary_loss(pred, target, num_classes, ignore_index=255)
    loss = jax.block_until_ready(loss)

    ref = _reference_boundary_loss(pred, target, num_classes, ignore_index=255)
    assert jnp.allclose(loss, ref, rtol=2e-2, atol=2e-2), (float(loss), float(ref))

    print("KERNEL_OK")
</pallas_src>

<mosaic_0001>
module attributes {stable_mosaic.version = 11 : i64} {
  func.func @_boundary_loss_kernel(%arg0: i32, %arg1: memref<1xi32, #tpu.memory_space<smem>>, %arg2: memref<1x16x128xf32, #tpu.memory_space<vmem>>, %arg3: memref<16x128xf32, #tpu.memory_space<vmem>>, %arg4: memref<16x128xi32, #tpu.memory_space<vmem>>, %arg5: memref<8x128xf32, #tpu.memory_space<vmem>>) attributes {dimension_semantics = [#tpu.dimension_semantics<parallel>], iteration_bounds = array<i64: 4>, scalar_prefetch = 1 : i64, scratch_operands = 0 : i64, tpu.core_type = #tpu.core_type<tc>, window_params = [{transform_indices = @transform_0, window_bounds = array<i64: 1, 16, 128>}, {pipeline_mode = #tpu.pipeline_mode<synchronous>, transform_indices = @transform_1, window_bounds = array<i64: 16, 128>}, {pipeline_mode = #tpu.pipeline_mode<synchronous>, transform_indices = @transform_2, window_bounds = array<i64: 16, 128>}, {transform_indices = @transform_3, window_bounds = array<i64: 8, 128>}]} {
    %c0 = arith.constant 0 : index
    %c0_0 = arith.constant 0 : index
    %c0_1 = arith.constant 0 : index
    %0 = vector.load %arg2[%c0, %c0_0, %c0_1] : memref<1x16x128xf32, #tpu.memory_space<vmem>>, vector<1x16x128xf32>
    %1 = vector.shape_cast %0 : vector<1x16x128xf32> to vector<16x128xf32>
    %c0_2 = arith.constant 0 : index
    %c0_3 = arith.constant 0 : index
    %2 = vector.load %arg3[%c0_2, %c0_3] : memref<16x128xf32, #tpu.memory_space<vmem>>, vector<16x128xf32>
    %c0_4 = arith.constant 0 : index
    %c0_5 = arith.constant 0 : index
    %3 = vector.load %arg4[%c0_4, %c0_5] : memref<16x128xi32, #tpu.memory_space<vmem>>, vector<16x128xi32>
    %4 = tpu.iota {dimensions = array<i32: 0>} : vector<16x128xi32>
    %5 = tpu.iota {dimensions = array<i32: 1>} : vector<16x128xi32>
    %c0_i32 = arith.constant 0 : i32
    %6 = vector.broadcast %c0_i32 : i32 to vector<16x128xi32>
    %7 = arith.cmpi eq, %4, %6 : vector<16x128xi32>
    %c15_i32 = arith.constant 15 : i32
    %8 = vector.broadcast %c15_i32 : i32 to vector<16x128xi32>
    %9 = arith.cmpi eq, %4, %8 : vector<16x128xi32>
    %c0_i32_6 = arith.constant 0 : i32
    %10 = vector.broadcast %c0_i32_6 : i32 to vector<16x128xi32>
    %11 = arith.cmpi eq, %5, %10 : vector<16x128xi32>
    %c127_i32 = arith.constant 127 : i32
    %12 = vector.broadcast %c127_i32 : i32 to vector<16x128xi32>
    %13 = arith.cmpi eq, %5, %12 : vector<16x128xi32>
    %c16_i32 = arith.constant 16 : i32
    %14 = vector.broadcast %c16_i32 : i32 to vector<16x128xi32>
    %15 = arith.cmpi slt, %4, %14 : vector<16x128xi32>
    %c16_i32_7 = arith.constant 16 : i32
    %16 = vector.broadcast %c16_i32_7 : i32 to vector<16x128xi32>
    %17 = arith.cmpi slt, %5, %16 : vector<16x128xi32>
    %18 = arith.andi %15, %17 : vector<16x128xi1>
    %19 = arith.subf %1, %2 : vector<16x128xf32>
    %20 = math.exp %19 : vector<16x128xf32>
    %cst = arith.constant 0.000000e+00 : f32
    %21 = vector.broadcast %cst : f32 to vector<16x128xf32>
    %22 = arith.select %18, %20, %21 : vector<16x128xi1>, vector<16x128xf32>
    %23 = vector.broadcast %arg0 : i32 to vector<16x128xi32>
    %24 = arith.cmpi eq, %3, %23 : vector<16x128xi32>
    %25 = arith.andi %18, %24 : vector<16x128xi1>
    %cst_8 = arith.constant 1.000000e+00 : f32
    %cst_9 = arith.constant 0.000000e+00 : f32
    %26 = vector.broadcast %cst_8 : f32 to vector<16x128xf32>
    %27 = vector.broadcast %cst_9 : f32 to vector<16x128xf32>
    %28 = arith.select %25, %26, %27 : vector<16x128xi1>, vector<16x128xf32>
    %c1_i32 = arith.constant 1 : i32
    %29 = tpu.dynamic_rotate %22 by %c1_i32 dim 0 : vector<16x128xf32>, i32 -> vector<16x128xf32>
    %cst_10 = arith.constant 0.000000e+00 : f32
    %30 = vector.broadcast %cst_10 : f32 to vector<16x128xf32>
    %31 = arith.select %7, %30, %29 : vector<16x128xi1>, vector<16x128xf32>
    %c15_i32_11 = arith.constant 15 : i32
    %32 = tpu.dynamic_rotate %22 by %c15_i32_11 dim 0 : vector<16x128xf32>, i32 -> vector<16x128xf32>
    %cst_12 = arith.constant 0.000000e+00 : f32
    %33 = vector.broadcast %cst_12 : f32 to vector<16x128xf32>
    %34 = arith.select %9, %33, %32 : vector<16x128xi1>, vector<16x128xf32>
    %cst_13 = arith.constant 2.000000e+00 : f32
    %35 = vector.broadcast %cst_13 : f32 to vector<16x128xf32>
    %36 = arith.mulf %35, %22 : vector<16x128xf32>
    %37 = arith.addf %31, %36 : vector<16x128xf32>
    %38 = arith.addf %37, %34 : vector<16x128xf32>
    %c127_i32_14 = arith.constant 127 : i32
    %39 = tpu.dynamic_rotate %38 by %c127_i32_14 dim 1 : vector<16x128xf32>, i32 -> vector<16x128xf32>
    %cst_15 = arith.constant 0.000000e+00 : f32
    %40 = vector.broadcast %cst_15 : f32 to vector<16x128xf32>
    %41 = arith.select %13, %40, %39 : vector<16x128xi1>, vector<16x128xf32>
    %c1_i32_16 = arith.constant 1 : i32
    %42 = tpu.dynamic_rotate %38 by %c1_i32_16 dim 1 : vector<16x128xf32>, i32 -> vector<16x128xf32>
    %cst_17 = arith.constant 0.000000e+00 : f32
    %43 = vector.broadcast %cst_17 : f32 to vector<16x128xf32>
    %44 = arith.select %11, %43, %42 : vector<16x128xi1>, vector<16x128xf32>
    %45 = arith.subf %41, %44 : vector<16x128xf32>
    %c1_i32_18 = arith.constant 1 : i32
    %46 = tpu.dynamic_rotate %22 by %c1_i32_18 dim 1 : vector<16x128xf32>, i32 -> vector<16x128xf32>
    %cst_19 = arith.constant 0.000000e+00 : f32
    %47 = vector.broadcast %cst_19 : f32 to vector<16x128xf32>
    %48 = arith.select %11, %47, %46 : vector<16x128xi1>, vector<16x128xf32>
    %c127_i32_20 = arith.constant 127 : i32
    %49 = tpu.dynamic_rotate %22 by %c127_i32_20 dim 1 : vector<16x128xf32>, i32 -> vector<16x128xf32>
    %cst_21 = arith.constant 0.000000e+00 : f32
    %50 = vector.broadcast %cst_21 : f32 to vector<16x128xf32>
    %51 = arith.select %13, %50, %49 : vector<16x128xi1>, vector<16x128xf32>
    %cst_22 = arith.constant 2.000000e+00 : f32
    %52 = vector.broadcast %cst_22 : f32 to vector<16x128xf32>
    %53 = arith.mulf %52, %22 : vector<16x128xf32>
    %54 = arith.addf %48, %53 : vector<16x128xf32>
    %55 = arith.addf %54, %51 : vector<16x128xf32>
    %c15_i32_23 = arith.constant 15 : i32
    %56 = tpu.dynamic_rotate %55 by %c15_i32_23 dim 0 : vector<16x128xf32>, i32 -> vector<16x128xf32>
    %cst_24 = arith.constant 0.000000e+00 : f32
    %57 = vector.broadcast %cst_24 : f32 to vector<16x128xf32>
    %58 = arith.select %9, %57, %56 : vector<16x128xi1>, vector<16x128xf32>
    %c1_i32_25 = arith.constant 1 : i32
    %59 = tpu.dynamic_rotate %55 by %c1_i32_25 dim 0 : vector<16x128xf32>, i32 -> vector<16x128xf32>
    %cst_26 = arith.constant 0.000000e+00 : f32
    %60 = vector.broadcast %cst_26 : f32 to vector<16x128xf32>
    %61 = arith.select %7, %60, %59 : vector<16x128xi1>, vector<16x128xf32>
    %62 = arith.subf %58, %61 : vector<16x128xf32>
    %63 = arith.mulf %45, %45 : vector<16x128xf32>
    %64 = arith.mulf %62, %62 : vector<16x128xf32>
    %65 = arith.addf %63, %64 : vector<16x128xf32>
    %66 = math.sqrt %65 : vector<16x128xf32>
    %cst_27 = arith.constant 0x7F800000 : f32
    %67 = vector.broadcast %cst_27 : f32 to vector<16x128xf32>
    %68 = arith.select %18, %66, %67 : vector<16x128xi1>, vector<16x128xf32>
    %69 = vector.shape_cast %68 : vector<16x128xf32> to vector<1x16x128xf32>
    %cst_28 = arith.constant dense<0x7F800000> : vector<1xf32>
    %70 = vector.multi_reduction <minimumf>, %69, %cst_28 [1, 2] : vector<1x16x128xf32> to vector<1xf32>
    %71 = vector.shape_cast %70 : vector<1xf32> to vector<1x1x1xf32>
    %72 = vector.extract %71[0, 0, 0] : f32 from vector<1x1x1xf32>
    %cst_29 = arith.constant 0.000000e+00 : f32
    %73 = vector.broadcast %cst_29 : f32 to vector<16x128xf32>
    %74 = arith.select %18, %66, %73 : vector<16x128xi1>, vector<16x128xf32>
    %75 = vector.shape_cast %74 : vector<16x128xf32> to vector<1x16x128xf32>
    %cst_30 = arith.constant dense<0xFF800000> : vector<1xf32>
    %76 = vector.multi_reduction <maximumf>, %75, %cst_30 [1, 2] : vector<1x16x128xf32> to vector<1xf32>
    %77 = vector.shape_cast %76 : vector<1xf32> to vector<1x1x1xf32>
    %78 = vector.extract %77[0, 0, 0] : f32 from vector<1x1x1xf32>
    %79 = arith.subf %78, %72 : f32
    %cst_31 = arith.constant 9.99999997E-7 : f32
    %80 = arith.addf %79, %cst_31 : f32
    %cst_32 = arith.constant 1.000000e+00 : f32
    %81 = arith.divf %cst_32, %80 : f32
    %82 = vector.broadcast %72 : f32 to vector<16x128xf32>
    %83 = arith.subf %66, %82 : vector<16x128xf32>
    %84 = vector.broadcast %81 : f32 to vector<16x128xf32>
    %85 = arith.mulf %83, %84 : vector<16x128xf32>
    %c1_i32_33 = arith.constant 1 : i32
    %86 = tpu.dynamic_rotate %28 by %c1_i32_33 dim 0 : vector<16x128xf32>, i32 -> vector<16x128xf32>
    %cst_34 = arith.constant 0.000000e+00 : f32
    %87 = vector.broadcast %cst_34 : f32 to vector<16x128xf32>
    %88 = arith.select %7, %87, %86 : vector<16x128xi1>, vector<16x128xf32>
    %c15_i32_35 = arith.constant 15 : i32
    %89 = tpu.dynamic_rotate %28 by %c15_i32_35 dim 0 : vector<16x128xf32>, i32 -> vector<16x128xf32>
    %cst_36 = arith.constant 0.000000e+00 : f32
    %90 = vector.broadcast %cst_36 : f32 to vector<16x128xf32>
    %91 = arith.select %9, %90, %89 : vector<16x128xi1>, vector<16x128xf32>
    %cst_37 = arith.constant 2.000000e+00 : f32
    %92 = vector.broadcast %cst_37 : f32 to vector<16x128xf32>
    %93 = arith.mulf %92, %28 : vector<16x128xf32>
    %94 = arith.addf %88, %93 : vector<16x128xf32>
    %95 = arith.addf %94, %91 : vector<16x128xf32>
    %c127_i32_38 = arith.constant 127 : i32
    %96 = tpu.dynamic_rotate %95 by %c127_i32_38 dim 1 : vector<16x128xf32>, i32 -> vector<16x128xf32>
    %cst_39 = arith.constant 0.000000e+00 : f32
    %97 = vector.broadcast %cst_39 : f32 to vector<16x128xf32>
    %98 = arith.select %13, %97, %96 : vector<16x128xi1>, vector<16x128xf32>
    %c1_i32_40 = arith.constant 1 : i32
    %99 = tpu.dynamic_rotate %95 by %c1_i32_40 dim 1 : vector<16x128xf32>, i32 -> vector<16x128xf32>
    %cst_41 = arith.constant 0.000000e+00 : f32
    %100 = vector.broadcast %cst_41 : f32 to vector<16x128xf32>
    %101 = arith.select %11, %100, %99 : vector<16x128xi1>, vector<16x128xf32>
    %102 = arith.subf %98, %101 : vector<16x128xf32>
    %c1_i32_42 = arith.constant 1 : i32
    %103 = tpu.dynamic_rotate %28 by %c1_i32_42 dim 1 : vector<16x128xf32>, i32 -> vector<16x128xf32>
    %cst_43 = arith.constant 0.000000e+00 : f32
    %104 = vector.broadcast %cst_43 : f32 to vector<16x128xf32>
    %105 = arith.select %11, %104, %103 : vector<16x128xi1>, vector<16x128xf32>
    %c127_i32_44 = arith.constant 127 : i32
    %106 = tpu.dynamic_rotate %28 by %c127_i32_44 dim 1 : vector<16x128xf32>, i32 -> vector<16x128xf32>
    %cst_45 = arith.constant 0.000000e+00 : f32
    %107 = vector.broadcast %cst_45 : f32 to vector<16x128xf32>
    %108 = arith.select %13, %107, %106 : vector<16x128xi1>, vector<16x128xf32>
    %cst_46 = arith.constant 2.000000e+00 : f32
    %109 = vector.broadcast %cst_46 : f32 to vector<16x128xf32>
    %110 = arith.mulf %109, %28 : vector<16x128xf32>
    %111 = arith.addf %105, %110 : vector<16x128xf32>
    %112 = arith.addf %111, %108 : vector<16x128xf32>
    %c15_i32_47 = arith.constant 15 : i32
    %113 = tpu.dynamic_rotate %112 by %c15_i32_47 dim 0 : vector<16x128xf32>, i32 -> vector<16x128xf32>
    %cst_48 = arith.constant 0.000000e+00 : f32
    %114 = vector.broadcast %cst_48 : f32 to vector<16x128xf32>
    %115 = arith.select %9, %114, %113 : vector<16x128xi1>, vector<16x128xf32>
    %c1_i32_49 = arith.constant 1 : i32
    %116 = tpu.dynamic_rotate %112 by %c1_i32_49 dim 0 : vector<16x128xf32>, i32 -> vector<16x128xf32>
    %cst_50 = arith.constant 0.000000e+00 : f32
    %117 = vector.broadcast %cst_50 : f32 to vector<16x128xf32>
    %118 = arith.select %7, %117, %116 : vector<16x128xi1>, vector<16x128xf32>
    %119 = arith.subf %115, %118 : vector<16x128xf32>
    %120 = arith.mulf %102, %102 : vector<16x128xf32>
    %121 = arith.mulf %119, %119 : vector<16x128xf32>
    %122 = arith.addf %120, %121 : vector<16x128xf32>
    %123 = math.sqrt %122 : vector<16x128xf32>
    %cst_51 = arith.constant 0x7F800000 : f32
    %124 = vector.broadcast %cst_51 : f32 to vector<16x128xf32>
    %125 = arith.select %18, %123, %124 : vector<16x128xi1>, vector<16x128xf32>
    %126 = vector.shape_cast %125 : vector<16x128xf32> to vector<1x16x128xf32>
    %cst_52 = arith.constant dense<0x7F800000> : vector<1xf32>
    %127 = vector.multi_reduction <minimumf>, %126, %cst_52 [1, 2] : vector<1x16x128xf32> to vector<1xf32>
    %128 = vector.shape_cast %127 : vector<1xf32> to vector<1x1x1xf32>
    %129 = vector.extract %128[0, 0, 0] : f32 from vector<1x1x1xf32>
    %cst_53 = arith.constant 0.000000e+00 : f32
    %130 = vector.broadcast %cst_53 : f32 to vector<16x128xf32>
    %131 = arith.select %18, %123, %130 : vector<16x128xi1>, vector<16x128xf32>
    %132 = vector.shape_cast %131 : vector<16x128xf32> to vector<1x16x128xf32>
    %cst_54 = arith.constant dense<0xFF800000> : vector<1xf32>
    %133 = vector.multi_reduction <maximumf>, %132, %cst_54 [1, 2] : vector<1x16x128xf32> to vector<1xf32>
    %134 = vector.shape_cast %133 : vector<1xf32> to vector<1x1x1xf32>
    %135 = vector.extract %134[0, 0, 0] : f32 from vector<1x1x1xf32>
    %136 = arith.subf %135, %129 : f32
    %cst_55 = arith.constant 9.99999997E-7 : f32
    %137 = arith.addf %136, %cst_55 : f32
    %cst_56 = arith.constant 1.000000e+00 : f32
    %138 = arith.divf %cst_56, %137 : f32
    %139 = vector.broadcast %129 : f32 to vector<16x128xf32>
    %140 = arith.subf %123, %139 : vector<16x128xf32>
    %141 = vector.broadcast %138 : f32 to vector<16x128xf32>
    %142 = arith.mulf %140, %141 : vector<16x128xf32>
    %143 = math.log %85 : vector<16x128xf32>
    %cst_57 = arith.constant -1.000000e+02 : f32
    %144 = vector.broadcast %cst_57 : f32 to vector<16x128xf32>
    %145 = arith.maximumf %143, %144 : vector<16x128xf32>
    %cst_58 = arith.constant 1.000000e+00 : f32
    %146 = vector.broadcast %cst_58 : f32 to vector<16x128xf32>
    %147 = arith.subf %146, %85 : vector<16x128xf32>
    %148 = math.log %147 : vector<16x128xf32>
    %cst_59 = arith.constant -1.000000e+02 : f32
    %149 = vector.broadcast %cst_59 : f32 to vector<16x128xf32>
    %150 = arith.maximumf %148, %149 : vector<16x128xf32>
    %151 = arith.mulf %142, %145 : vector<16x128xf32>
    %cst_60 = arith.constant 1.000000e+00 : f32
    %152 = vector.broadcast %cst_60 : f32 to vector<16x128xf32>
    %153 = arith.subf %152, %142 : vector<16x128xf32>
    %154 = arith.mulf %153, %150 : vector<16x128xf32>
    %155 = arith.addf %151, %154 : vector<16x128xf32>
    %cst_61 = arith.constant 0.000000e+00 : f32
    %156 = vector.broadcast %cst_61 : f32 to vector<16x128xf32>
    %157 = arith.subf %156, %155 : vector<16x128xf32>
    %c255_i32 = arith.constant 255 : i32
    %158 = vector.broadcast %c255_i32 : i32 to vector<16x128xi32>
    %159 = arith.cmpi ne, %3, %158 : vector<16x128xi32>
    %160 = arith.andi %18, %159 : vector<16x128xi1>
    %c0_62 = arith.constant 0 : index
    %161 = memref.load %arg1[%c0_62] : memref<1xi32, #tpu.memory_space<smem>>
    %c1_i32_63 = arith.constant 1 : i32
    %162 = arith.maxsi %161, %c1_i32_63 : i32
    %163 = arith.sitofp %162 : i32 to f32
    %cst_64 = arith.constant 1.000000e+00 : f32
    %164 = arith.divf %cst_64, %163 : f32
    %cst_65 = arith.constant 0.000000e+00 : f32
    %165 = vector.broadcast %cst_65 : f32 to vector<16x128xf32>
    %166 = arith.select %160, %157, %165 : vector<16x128xi1>, vector<16x128xf32>
    %167 = vector.shape_cast %166 : vector<16x128xf32> to vector<1x16x128xf32>
    %cst_66 = arith.constant dense<0.000000e+00> : vector<1xf32>
    %168 = vector.multi_reduction <add>, %167, %cst_66 [1, 2] : vector<1x16x128xf32> to vector<1xf32>
    %169 = vector.shape_cast %168 : vector<1xf32> to vector<1x1x1xf32>
    %170 = vector.extract %169[0, 0, 0] : f32 from vector<1x1x1xf32>
    %171 = arith.mulf %170, %164 : f32
    %172 = vector.broadcast %171 : f32 to vector<8x128xf32>
    %c0_67 = arith.constant 0 : index
    %c0_68 = arith.constant 0 : index
    %173 = vector.load %arg5[%c0_67, %c0_68] : memref<8x128xf32, #tpu.memory_space<vmem>>, vector<8x128xf32>
    tpu.vector_store %arg5[%c0_67, %c0_68], %172 {strides = array<i32>} : memref<8x128xf32, #tpu.memory_space<vmem>>, vector<8x128xf32>,
    return
  }
  func.func @transform_0(%arg0: i32, %arg1: memref<1xi32, #tpu.memory_space<smem>>) -> (i32, i32, i32) {
    %c0_i32 = arith.constant 0 : i32
    %c0_i32_0 = arith.constant 0 : i32
    %c0_i32_1 = arith.constant 0 : i32
    return %arg0, %c0_i32, %c0_i32_0 : i32, i32, i32
  }
  func.func @transform_1(%arg0: i32, %arg1: memref<1xi32, #tpu.memory_space<smem>>) -> (i32, i32) {
    %c0_i32 = arith.constant 0 : i32
    %c0_i32_0 = arith.constant 0 : i32
    %c0_i32_1 = arith.constant 0 : i32
    return %c0_i32, %c0_i32_0 : i32, i32
  }
  func.func @transform_2(%arg0: i32, %arg1: memref<1xi32, #tpu.memory_space<smem>>) -> (i32, i32) {
    %c0_i32 = arith.constant 0 : i32
    %c0_i32_0 = arith.constant 0 : i32
    %c0_i32_1 = arith.constant 0 : i32
    return %c0_i32, %c0_i32_0 : i32, i32
  }
  func.func @transform_3(%arg0: i32, %arg1: memref<1xi32, #tpu.memory_space<smem>>) -> (i32, i32) {
    %c0_i32 = arith.constant 0 : i32
    %c0_i32_0 = arith.constant 0 : i32
    return %arg0, %c0_i32 : i32, i32
  }
}

</mosaic_0001>

<llo_original>
// kernel: tpu_custom_call.1
$region0: #{tpu_custom_call.1}
  #allocation0 [shape = 'u32[]', space=smem, size = 0x4, offset = 0x4, fixed_abs, tag = 'smem constant byte address 0x4 - core index']
  #allocation1 [shape = 'u32[144,128]{1,0:T(1,128)}', space=vmem, size = 0x12000, scoped, tag = 'internal scratch']
  #allocation2 [shape = 's32[1]{0}', space=sflag, size = 0x4, scoped, tag = 'scoped memory for tpu_custom_call.1']
  #allocation3 [shape = 's32[1]{0:T(128)S(6)}', space=smem, size = 0x200, scoped, tag = 'prefetched SMEM operand 0']
  %s0 = inlined_call_operand.<no memory space> [shape: s32[1], index: 0, kind: input, shape index: {}]
  %s1 = inlined_call_operand.hbm [shape: f32[4,16,128], index: 1, kind: input, shape index: {}]
  %s2 = inlined_call_operand.hbm [shape: f32[16,128], index: 2, kind: input, shape index: {}]
  %s3 = inlined_call_operand.hbm [shape: s32[16,128], index: 3, kind: input, shape index: {}]
  %s4 = inlined_call_operand.hbm [shape: f32[32,128], index: 4, kind: output, shape index: {}]
  %s5 = sld [smem:[#allocation0]]
  $region57: #{tpu_custom_call.1} parent=0
    _
  %s7 = ssub.s32 1, %s5
  %s8 = scalar_select 0, %s7, %s5
  %9 = sst [smem:[#allocation3]] %s0
  $region1: #{tpu_custom_call.1} parent=0
    #allocation4 [shape = 'u8[16384]{0}', space=vmem, size = 0x4000, scoped, tag = 'input window, operand 1']
    #allocation5 [shape = 's32[2]{0}', space=sflag, size = 0x8, scoped, tag = 'scoped memory for tpu_custom_call.1']
    #allocation6 [shape = 's32[2]{0}', space=sflag, size = 0x8, scoped, tag = 'scoped memory for tpu_custom_call.1']
    #allocation7 [shape = 'u8[8192]{0}', space=vmem, size = 0x2000, scoped, tag = 'input window, operand 2, single buffered']
    #allocation8 [shape = 's32[1]{0}', space=sflag, size = 0x4, scoped, tag = 'scoped memory for tpu_custom_call.1']
    #allocation9 [shape = 'u8[8192]{0}', space=vmem, size = 0x2000, scoped, tag = 'input window, operand 3, single buffered']
    #allocation10 [shape = 'u8[8192]{0}', space=vmem, size = 0x2000, scoped, tag = 'output window, operand 0']
    %10 = vsyncpa [#allocation5], 0
    %s11 = scalar_lea.sflag [#allocation5], 1
    %12 = vsyncpa %s11, 0
    %13 = vsyncpa [#allocation8], 0
    %14 = vsyncpa [#allocation6], 0
    %s15 = scalar_lea.sflag [#allocation6], 1
    %16 = vsyncpa %s15, 0
    loop: start=0, step=1, limit=6
    $region2: #{tpu_custom_call.1} parent=1 // loop_pre_header
      _
    $region3: #{tpu_custom_call.1} parent=1 // loop_header
      %s18 = sphi 0, %s22
      %p19 = scmp.ge.s32.totalorder %s18, 6
      %s28 = sphi 0, %s30
      %s31 = sphi 0, %s28
      %s32 = sphi 0, %s31
      %s48 = sphi 0, %s32
      %s52 = sphi 0, %s52
      %s54 = sphi 0, %s52
      %s55 = sphi 0, %s54
      %s69 = sphi 0, %s55
      %s73 = sphi 0, %s73
      %s75 = sphi 0, %s73
      %s76 = sphi 0, %s75
      %s90 = sphi 0, %s76
      %s96 = sphi 0, %s98
      %s99 = sphi 0, %s96
      %s100 = sphi 0, %s99
      %s116 = sphi 0, %s100
    $region4: #{tpu_custom_call.1} parent=1 // loop_header_branch
      %21 = sbr.rel (%p19) target = $region8
    $region5: #{tpu_custom_call.1} parent=1 // loop_body
      %s23 = ssub.s32 %s18, 1
      %s24 = ssub.s32 %s18, 2
      %s25 = sadd.s32 %s18, 1
      %s26 = ssub.s32 %s18, %s25
      %p27 = scmp.eq.s32.totalorder %s26, 0
      %s29 = sadd.s32 %s28, 1
      %s30 = scalar_select %p27, %s28, %s29
      %p33 = pneg %p27
      %p34 = scmp.eq.s32.totalorder %s18, 3
      %p35 = por %p33, %p34
      %p36 = scmp.ne.s32.totalorder %s28, %s31
      %p37 = scmp.eq.s32.totalorder %s18, 0
      %p38 = por %p36, %p37
      %p39 = scmp.ne.s32.totalorder %s28, %s31
      %p40 = scmp.eq.s32.totalorder %s23, 3
      %p41 = por %p39, %p40
      %p42 = scmp.ne.s32.totalorder %s31, %s32
      %p43 = scmp.eq.s32.totalorder %s23, 0
      %p44 = por %p42, %p43
      %p45 = scmp.ne.s32.totalorder %s31, %s32
      %p46 = scmp.eq.s32.totalorder %s24, 3
      %p47 = por %p45, %p46
      %p49 = scmp.ne.s32.totalorder %s32, %s48
      %p50 = scmp.eq.s32.totalorder %s24, 0
      %p51 = por %p49, %p50
      %s53 = sadd.s32 %s52, 1
      %p56 = scmp.eq.s32.totalorder %s18, 3
      %p57 = scmp.ne.s32.totalorder %s52, %s54
      %p58 = scmp.eq.s32.totalorder %s18, 0
      %p59 = por %p57, %p58
      %p60 = scmp.ne.s32.totalorder %s52, %s54
      %p61 = scmp.eq.s32.totalorder %s23, 3
      %p62 = por %p60, %p61
      %p63 = scmp.ne.s32.totalorder %s54, %s55
      %p64 = scmp.eq.s32.totalorder %s23, 0
      %p65 = por %p63, %p64
      %p66 = scmp.ne.s32.totalorder %s54, %s55
      %p67 = scmp.eq.s32.totalorder %s24, 3
      %p68 = por %p66, %p67
      %p70 = scmp.ne.s32.totalorder %s55, %s69
      %p71 = scmp.eq.s32.totalorder %s24, 0
      %p72 = por %p70, %p71
      %s74 = sadd.s32 %s73, 1
      %p77 = scmp.eq.s32.totalorder %s18, 3
      %p78 = scmp.ne.s32.totalorder %s73, %s75
      %p79 = scmp.eq.s32.totalorder %s18, 0
      %p80 = por %p78, %p79
      %p81 = scmp.ne.s32.totalorder %s73, %s75
      %p82 = scmp.eq.s32.totalorder %s23, 3
      %p83 = por %p81, %p82
      %p84 = scmp.ne.s32.totalorder %s75, %s76
      %p85 = scmp.eq.s32.totalorder %s23, 0
      %p86 = por %p84, %p85
      %p87 = scmp.ne.s32.totalorder %s75, %s76
      %p88 = scmp.eq.s32.totalorder %s24, 3
      %p89 = por %p87, %p88
      %p91 = scmp.ne.s32.totalorder %s76, %s90
      %p92 = scmp.eq.s32.totalorder %s24, 0
      %p93 = por %p91, %p92
      %s94 = ssub.s32 %s18, %s25
      %p95 = scmp.eq.s32.totalorder %s94, 0
      %s97 = sadd.s32 %s96, 1
      %s98 = scalar_select %p95, %s96, %s97
      %p101 = pneg %p95
      %p102 = scmp.eq.s32.totalorder %s18, 3
      %p103 = por %p101, %p102
      %p104 = scmp.ne.s32.totalorder %s96, %s99
      %p105 = scmp.eq.s32.totalorder %s18, 0
      %p106 = por %p104, %p105
      %p107 = scmp.ne.s32.totalorder %s96, %s99
      %p108 = scmp.eq.s32.totalorder %s23, 3
      %p109 = por %p107, %p108
      %p110 = scmp.ne.s32.totalorder %s99, %s100
      %p111 = scmp.eq.s32.totalorder %s23, 0
      %p112 = por %p110, %p111
      %p113 = scmp.ne.s32.totalorder %s99, %s100
      %p114 = scmp.eq.s32.totalorder %s24, 3
      %p115 = por %p113, %p114
      %p117 = scmp.ne.s32.totalorder %s100, %s116
      %p118 = scmp.eq.s32.totalorder %s24, 0
      %p119 = por %p117, %p118
      %p120 = scmp.le.s32.totalorder 1, %s18
      %p121 = scmp.lt.s32.totalorder %s18, 5
      %p122 = pnand %p120, %p121
      %p123 = pneg %p122
      // Predicated region
      $region9: #{tpu_custom_call.1} parent=5 // pred_check
        _
      $region10: #{tpu_custom_call.1} parent=5 // pred_check_branch
        %125 = sbr.rel (%p122) target = $region12
      $region11: #{tpu_custom_call.1} parent=5 // pred_region
        %s126 = ssub.s32 %s18, 1
        // Predicated region
        $region13: #{tpu_custom_call.1} parent=11 // pred_check
          %p127 = pneg %p65
        $region14: #{tpu_custom_call.1} parent=11 // pred_check_branch
          %129 = sbr.rel (%p127) target = $region16
        $region15: #{tpu_custom_call.1} parent=11 // pred_region
          %s131 = ssub.s32 256, 256
          %132 = vsyncadd [#allocation8], %s131
          %s133 = sshll.u32 [#allocation7], 4
          %s134 = int_to_ptr.vmem [resolvable:$true] %s133
          %139 = dma.hbm_to_vmem [thread:$0]  %s2, 256, %s134, [#allocation8], 128, 128, 8
        $region16: #{tpu_custom_call.1} parent=11 // pred_fallthru
          _
        // Predicated region
        $region17: #{tpu_custom_call.1} parent=11 // pred_check
          %p140 = pneg %p86
        $region18: #{tpu_custom_call.1} parent=11 // pred_check_branch
          %142 = sbr.rel (%p140) target = $region20
        $region19: #{tpu_custom_call.1} parent=11 // pred_region
          %s144 = ssub.s32 256, 256
          %145 = vsyncadd [#allocation8], %s144
          %s146 = sshll.u32 [#allocation9], 4
          %s147 = int_to_ptr.vmem [resolvable:$true] %s146
          %152 = dma.hbm_to_vmem [thread:$0]  %s3, 256, %s147, [#allocation8], 128, 128, 8
        $region20: #{tpu_custom_call.1} parent=11 // pred_fallthru
          _
      $region12: #{tpu_custom_call.1} parent=5 // pred_fallthru
        _
      %p153 = scmp.lt.s32.totalorder %s18, 4
      // Predicated region
      $region21: #{tpu_custom_call.1} parent=5 // pred_check
        %p154 = pneg %p153
      $region22: #{tpu_custom_call.1} parent=5 // pred_check_branch
        %156 = sbr.rel (%p154) target = $region24
      $region23: #{tpu_custom_call.1} parent=5 // pred_region
        // Predicated region
        $region25: #{tpu_custom_call.1} parent=23 // pred_check
          %p157 = pneg %p38
        $region26: #{tpu_custom_call.1} parent=23 // pred_check_branch
          %159 = sbr.rel (%p157) target = $region28
        $region27: #{tpu_custom_call.1} parent=23 // pred_region
          %s160 = sand.u32 %s28, 1
          %s161 = scalar_lea.sflag [#allocation5], %s160
          %s162 = sand.u32 %s28, 1
          %s163 = smul.addr %s162, 16
          %s164 = scalar_lea.vmem [#allocation4], %s163
          %s166 = ssub.s32 256, 256
          %167 = vsyncadd %s161, %s166
          %s168 = smul.addr %s18, 2
          %s169 = smul.addr %s168, 128
          %s170 = scalar_lea.hbm %s1, %s169
          %s171 = sshll.u32 %s164, 4
          %s172 = int_to_ptr.vmem [resolvable:$true] %s171
          %177 = dma.hbm_to_vmem [thread:$0]  %s170, 256, %s172, %s161, 128, 128, 8
        $region28: #{tpu_custom_call.1} parent=23 // pred_fallthru
          _
      $region24: #{tpu_custom_call.1} parent=5 // pred_fallthru
        _
      %p178 = scmp.le.s32.totalorder 1, %s18
      %p179 = scmp.lt.s32.totalorder %s18, 5
      %p180 = pnand %p178, %p179
      %p181 = pneg %p180
      // Predicated region
      $region29: #{tpu_custom_call.1} parent=5 // pred_check
        _
      $region30: #{tpu_custom_call.1} parent=5 // pred_check_branch
        %183 = sbr.rel (%p180) target = $region32
      $region31: #{tpu_custom_call.1} parent=5 // pred_region
        %s184 = ssub.s32 %s18, 1
        %s185 = sand.u32 %s31, 1
        %s186 = scalar_lea.sflag [#allocation5], %s185
        %s187 = sand.u32 %s31, 1
        %s188 = smul.addr %s187, 16
        %s189 = scalar_lea.vmem [#allocation4], %s188
        // Predicated region
        $region33: #{tpu_custom_call.1} parent=31 // pred_check
          %p190 = pneg %p44
        $region34: #{tpu_custom_call.1} parent=31 // pred_check_branch
          %192 = sbr.rel (%p190) target = $region36
        $region35: #{tpu_custom_call.1} parent=31 // pred_region
          %193 = dma.done %s186, 256
        $region36: #{tpu_custom_call.1} parent=31 // pred_fallthru
          _
        // Predicated region
        $region37: #{tpu_custom_call.1} parent=31 // pred_check
          %p194 = pneg %p65
        $region38: #{tpu_custom_call.1} parent=31 // pred_check_branch
          %196 = sbr.rel (%p194) target = $region40
        $region39: #{tpu_custom_call.1} parent=31 // pred_region
          %197 = dma.done [#allocation8], 256
        $region40: #{tpu_custom_call.1} parent=31 // pred_fallthru
          _
        // Predicated region
        $region41: #{tpu_custom_call.1} parent=31 // pred_check
          %p198 = pneg %p86
        $region42: #{tpu_custom_call.1} parent=31 // pred_check_branch
          %200 = sbr.rel (%p198) target = $region44
        $region43: #{tpu_custom_call.1} parent=31 // pred_region
          %201 = dma.done [#allocation8], 256
        $region44: #{tpu_custom_call.1} parent=31 // pred_fallthru
          _
        %s202 = sand.u32 %s31, 1
        %s203 = scalar_lea.sflag [#allocation5], %s202
        %s204 = sand.u32 %s31, 1
        %s205 = smul.addr %s204, 16
        %s206 = scalar_lea.vmem [#allocation4], %s205
        %p207 = pneg %p44
        %p208 = pneg %p41
        %p209 = pneg %p65
        %p210 = pneg %p62
        %p211 = pneg %p86
        %p212 = pneg %p83
        %p213 = pneg %p112
        %p214 = pneg %p109
        %s215 = sand.u32 %s99, 1
        %s216 = scalar_lea.sflag [#allocation6], %s215
        %s217 = sand.u32 %s99, 1
        %s218 = smul.addr %s217, 8
        %s219 = scalar_lea.vmem [#allocation10], %s218
        %v220 = vld [vmem:[%s189] sm:$0xff]
        %v221 = vld [vmem:[%s189 + $0x8] sm:$0xff]
        %v222 = vld [vmem:[#allocation7] sm:$0xff]
        %v223 = vld [vmem:[#allocation7 + $0x8] sm:$0xff]
        %v224 = vld [vmem:[#allocation9] sm:$0xff]
        %v225 = vld [vmem:[#allocation9 + $0x8] sm:$0xff]
        %v226 = vlaneseq
        %v227 = vshrl.u32 %v226, 7
        %v228 = vadd.s32 %v227, 8
        %v229 = vlaneseq
        %v230 = vand.u32 %v229, 127
        %vm231 = vcmp.eq.s32.totalorder %v227, 0
        %vm232 = vcmp.eq.s32.totalorder %v228, 0
        %vm233 = vcmp.eq.s32.totalorder %v227, 15
        %vm234 = vcmp.eq.s32.totalorder %v228, 15
        %vm235 = vcmp.eq.s32.totalorder %v230, 0
        %vm236 = vcmp.eq.s32.totalorder %v230, 127
        %vm237 = vcmp.lt.s32.totalorder %v227, 16
        %vm238 = vcmp.lt.s32.totalorder %v228, 16
        %vm239 = vcmp.lt.s32.totalorder %v230, 16
        %vm240 = vmand %vm237, %vm239
        %vm241 = vmand %vm238, %vm239
        %v242 = vsub.f32 %v220, %v222
        %v243 = vsub.f32 %v221, %v223
        %v244 = vmul.f32 %v242, 1.442695
        %v245 = vpow.pop %v244
        %v246 = vmul.f32 %v243, 1.442695
        %v247 = vpow.pop %v246
        %v248 = vsel %vm240, %v245, 0.0
        %v249 = vsel %vm241, %v247, 0.0
        %v250 = vstv %s23
        %vm251 = vcmp.eq.s32.totalorder %v224, %v250
        %vm252 = vcmp.eq.s32.totalorder %v225, %v250
        %vm253 = vmand %vm240, %vm251
        %vm254 = vmand %vm241, %vm252
        %v255 = vsel %vm253, 1.0, 0.0
        %v256 = vsel %vm254, 1.0, 0.0
        %v257 = vrot.slane %v248, 7
        %v258 = vrot.slane %v249, 7
        %vm259 = vcmp.lt.s32.totalorder %v227, 1
        %v260 = vsel %vm259, %v257, %v258
        %v261 = vsel %vm259, %v258, %v257
        %v262 = vsel %vm231, 0.0, %v261
        %v263 = vsel %vm232, 0.0, %v260
        %v264 = vrot.slane %v248, 1
        %v265 = vrot.slane %v249, 1
        %vm266 = vcmp.lt.s32.totalorder %v227, 7
        %v267 = vsel %vm266, %v264, %v265
        %v268 = vsel %vm266, %v265, %v264
        %v269 = vsel %vm233, 0.0, %v267
        %v270 = vsel %vm234, 0.0, %v268
        %v271 = vmul.f32 %v248, 2.0
        %v272 = vmul.f32 %v249, 2.0
        %v273 = vadd.f32 %v262, %v271
        %v274 = vadd.f32 %v263, %v272
        %v275 = vadd.f32 %v273, %v269
        %v276 = vadd.f32 %v274, %v270
        %277 = vrot.lane.b32.xlu0 %v275, 127
        %v278 = vpop.permute.xlu0 %277
        %279 = vrot.lane.b32.xlu0 %v276, 127
        %v280 = vpop.permute.xlu0 %279
        %v281 = vsel %vm236, 0.0, %v278
        %v282 = vsel %vm236, 0.0, %v280
        %283 = vrot.lane.b32.xlu0 %v275, 1
        %v284 = vpop.permute.xlu0 %283
        %285 = vrot.lane.b32.xlu0 %v276, 1
        %v286 = vpop.permute.xlu0 %285
        %v287 = vsel %vm235, 0.0, %v284
        %v288 = vsel %vm235, 0.0, %v286
        %v289 = vsub.f32 %v281, %v287
        %v290 = vsub.f32 %v282, %v288
        %291 = vrot.lane.b32.xlu0 %v248, 1
        %v292 = vpop.permute.xlu0 %291
        %293 = vrot.lane.b32.xlu0 %v249, 1
        %v294 = vpop.permute.xlu0 %293
        %v295 = vsel %vm235, 0.0, %v292
        %v296 = vsel %vm235, 0.0, %v294
        %297 = vrot.lane.b32.xlu0 %v248, 127
        %v298 = vpop.permute.xlu0 %297
        %299 = vrot.lane.b32.xlu0 %v249, 127
        %v300 = vpop.permute.xlu0 %299
        %v301 = vsel %vm236, 0.0, %v298
        %v302 = vsel %vm236, 0.0, %v300
        %v303 = vadd.f32 %v295, %v271
        %v304 = vadd.f32 %v296, %v272
        %v305 = vadd.f32 %v303, %v301
        %v306 = vadd.f32 %v304, %v302
        %v307 = vrot.slane %v305, 1
        %v308 = vrot.slane %v306, 1
        %v309 = vsel %vm266, %v307, %v308
        %v310 = vsel %vm266, %v308, %v307
        %v311 = vsel %vm233, 0.0, %v309
        %v312 = vsel %vm234, 0.0, %v310
        %v313 = vrot.slane %v305, 7
        %v314 = vrot.slane %v306, 7
        %v315 = vsel %vm259, %v313, %v314
        %v316 = vsel %vm259, %v314, %v313
        %v317 = vsel %vm231, 0.0, %v316
        %v318 = vsel %vm232, 0.0, %v315
        %v319 = vsub.f32 %v311, %v317
        %v320 = vsub.f32 %v312, %v318
        %v321 = vmul.f32 %v289, %v289
        %v322 = vmul.f32 %v290, %v290
        %v323 = vmul.f32 %v319, %v319
        %v324 = vmul.f32 %v320, %v320
        %v325 = vadd.f32 %v321, %v323
        %v326 = vadd.f32 %v322, %v324
        %v327 = vrsqrt.pop %v325
        %v328 = vmul.f32 %v325, %v327
        %vm329 = vcmp.eq.f32.partialorder %v325, inf
        %v330 = vsel %vm329, %v325, %v328
        %vm331 = vcmp.eq.f32.partialorder %v325, 0.0
        %v332 = vand.u32 %v325, 2147483648
        %v333 = vsel %vm331, %v332, %v330
        %v334 = vrsqrt.pop %v326
        %v335 = vmul.f32 %v326, %v334
        %vm336 = vcmp.eq.f32.partialorder %v326, inf
        %v337 = vsel %vm336, %v326, %v335
        %vm338 = vcmp.eq.f32.partialorder %v326, 0.0
        %v339 = vand.u32 %v326, 2147483648
        %v340 = vsel %vm338, %v339, %v337
        %v341 = vsel %vm240, %v333, inf
        %v342 = vsel %vm241, %v340, inf
        %v343 = vmin.f32 %v341, %v342
        %344 = vmin.xlane.f32.xlu0 %v343
        %v345 = vpop.xlane.xlu0 %344
        %v346 = vrot.slane %v345, 4
        %v347 = vmin.f32 %v345, %v346
        %v348 = vrot.slane %v347, 2
        %v349 = vmin.f32 %v347, %v348
        %v350 = vrot.slane %v349, 1
        %v351 = vmin.f32 %v349, %v350
        %s352 = vtos %v351
        %v353 = vsel %vm240, %v333, 0.0
        %v354 = vsel %vm241, %v340, 0.0
        %v355 = vmax.f32 %v353, %v354
        %356 = vmax.xlane.f32.xlu0 %v355
        %v357 = vpop.xlane.xlu0 %356
        %v358 = vrot.slane %v357, 4
        %v359 = vmax.f32 %v357, %v358
        %v360 = vrot.slane %v359, 2
        %v361 = vmax.f32 %v359, %v360
        %v362 = vrot.slane %v361, 1
        %v363 = vmax.f32 %v361, %v362
        %s364 = vtos %v363
        %s365 = ssub.f32 %s364, %s352
        %s366 = sadd.f32 %s365, 1e-06
        %v367 = vstv %s366
        %v368 = vrcp.pop %v367
        %s369 = vtos %v368
        %v370 = vstv %s352
        %v371 = vsub.f32 %v333, %v370
        %v372 = vsub.f32 %v340, %v370
        %v373 = vstv %s369
        %v374 = vmul.f32 %v371, %v373
        %v375 = vmul.f32 %v372, %v373
        %v376 = vrot.slane %v255, 7
        %v377 = vrot.slane %v256, 7
        %v378 = vsel %vm259, %v376, %v377
        %v379 = vsel %vm259, %v377, %v376
        %v380 = vsel %vm231, 0.0, %v379
        %v381 = vsel %vm232, 0.0, %v378
        %v382 = vrot.slane %v255, 1
        %v383 = vrot.slane %v256, 1
        %v384 = vsel %vm266, %v382, %v383
        %v385 = vsel %vm266, %v383, %v382
        %v386 = vsel %vm233, 0.0, %v384
        %v387 = vsel %vm234, 0.0, %v385
        %v388 = vmul.f32 %v255, 2.0
        %v389 = vmul.f32 %v256, 2.0
        %v390 = vadd.f32 %v380, %v388
        %v391 = vadd.f32 %v381, %v389
        %v392 = vadd.f32 %v390, %v386
        %v393 = vadd.f32 %v391, %v387
        %394 = vrot.lane.b32.xlu0 %v392, 127
        %v395 = vpop.permute.xlu0 %394
        %396 = vrot.lane.b32.xlu0 %v393, 127
        %v397 = vpop.permute.xlu0 %396
        %v398 = vsel %vm236, 0.0, %v395
        %v399 = vsel %vm236, 0.0, %v397
        %400 = vrot.lane.b32.xlu0 %v392, 1
        %v401 = vpop.permute.xlu0 %400
        %402 = vrot.lane.b32.xlu0 %v393, 1
        %v403 = vpop.permute.xlu0 %402
        %v404 = vsel %vm235, 0.0, %v401
        %v405 = vsel %vm235, 0.0, %v403
        %v406 = vsub.f32 %v398, %v404
        %v407 = vsub.f32 %v399, %v405
        %408 = vrot.lane.b32.xlu0 %v255, 1
        %v409 = vpop.permute.xlu0 %408
        %410 = vrot.lane.b32.xlu0 %v256, 1
        %v411 = vpop.permute.xlu0 %410
        %v412 = vsel %vm235, 0.0, %v409
        %v413 = vsel %vm235, 0.0, %v411
        %414 = vrot.lane.b32.xlu0 %v255, 127
        %v415 = vpop.permute.xlu0 %414
        %416 = vrot.lane.b32.xlu0 %v256, 127
        %v417 = vpop.permute.xlu0 %416
        %v418 = vsel %vm236, 0.0, %v415
        %v419 = vsel %vm236, 0.0, %v417
        %v420 = vadd.f32 %v412, %v388
        %v421 = vadd.f32 %v413, %v389
        %v422 = vadd.f32 %v420, %v418
        %v423 = vadd.f32 %v421, %v419
        %v424 = vrot.slane %v422, 1
        %v425 = vrot.slane %v423, 1
        %v426 = vsel %vm266, %v424, %v425
        %v427 = vsel %vm266, %v425, %v424
        %v428 = vsel %vm233, 0.0, %v426
        %v429 = vsel %vm234, 0.0, %v427
        %v430 = vrot.slane %v422, 7
        %v431 = vrot.slane %v423, 7
        %v432 = vsel %vm259, %v430, %v431
        %v433 = vsel %vm259, %v431, %v430
        %v434 = vsel %vm231, 0.0, %v433
        %v435 = vsel %vm232, 0.0, %v432
        %v436 = vsub.f32 %v428, %v434
        %v437 = vsub.f32 %v429, %v435
        %v438 = vmul.f32 %v406, %v406
        %v439 = vmul.f32 %v407, %v407
        %v440 = vmul.f32 %v436, %v436
        %v441 = vmul.f32 %v437, %v437
        %v442 = vadd.f32 %v438, %v440
        %v443 = vadd.f32 %v439, %v441
        %v444 = vrsqrt.pop %v442
        %v445 = vmul.f32 %v442, %v444
        %vm446 = vcmp.eq.f32.partialorder %v442, inf
        %v447 = vsel %vm446, %v442, %v445
        %vm448 = vcmp.eq.f32.partialorder %v442, 0.0
        %v449 = vand.u32 %v442, 2147483648
        %v450 = vsel %vm448, %v449, %v447
        %v451 = vrsqrt.pop %v443
        %v452 = vmul.f32 %v443, %v451
        %vm453 = vcmp.eq.f32.partialorder %v443, inf
        %v454 = vsel %vm453, %v443, %v452
        %vm455 = vcmp.eq.f32.partialorder %v443, 0.0
        %v456 = vand.u32 %v443, 2147483648
        %v457 = vsel %vm455, %v456, %v454
        %v458 = vsel %vm240, %v450, inf
        %v459 = vsel %vm241, %v457, inf
        %v460 = vmin.f32 %v458, %v459
        %461 = vmin.xlane.f32.xlu0 %v460
        %v462 = vpop.xlane.xlu0 %461
        %v463 = vrot.slane %v462, 4
        %v464 = vmin.f32 %v462, %v463
        %v465 = vrot.slane %v464, 2
        %v466 = vmin.f32 %v464, %v465
        %v467 = vrot.slane %v466, 1
        %v468 = vmin.f32 %v466, %v467
        %s469 = vtos %v468
        %v470 = vsel %vm240, %v450, 0.0
        %v471 = vsel %vm241, %v457, 0.0
        %v472 = vmax.f32 %v470, %v471
        %473 = vmax.xlane.f32.xlu0 %v472
        %v474 = vpop.xlane.xlu0 %473
        %v475 = vrot.slane %v474, 4
        %v476 = vmax.f32 %v474, %v475
        %v477 = vrot.slane %v476, 2
        %v478 = vmax.f32 %v476, %v477
        %v479 = vrot.slane %v478, 1
        %v480 = vmax.f32 %v478, %v479
        %s481 = vtos %v480
        %s482 = ssub.f32 %s481, %s469
        %s483 = sadd.f32 %s482, 1e-06
        %v484 = vstv %s483
        %v485 = vrcp.pop %v484
        %s486 = vtos %v485
        %v487 = vstv %s469
        %v488 = vsub.f32 %v450, %v487
        %v489 = vsub.f32 %v457, %v487
        %v490 = vstv %s486
        %v491 = vmul.f32 %v488, %v490
        %v492 = vmul.f32 %v489, %v490
        %v493 = vlog2.pop %v374
        %v494 = vmul.f32 %v493, 0.6931472
        %v495 = vlog2.pop %v375
        %v496 = vmul.f32 %v495, 0.6931472
        %v497 = vmax.f32 %v494, -100.0
        %v498 = vmax.f32 %v496, -100.0
        %v499 = vsub.f32 1.0, %v374
        %v500 = vsub.f32 1.0, %v375
        %v501 = vlog2.pop %v499
        %v502 = vmul.f32 %v501, 0.6931472
        %v503 = vlog2.pop %v500
        %v504 = vmul.f32 %v503, 0.6931472
        %v505 = vmax.f32 %v502, -100.0
        %v506 = vmax.f32 %v504, -100.0
        %v507 = vmul.f32 %v491, %v497
        %v508 = vmul.f32 %v492, %v498
        %v509 = vsub.f32 1.0, %v491
        %v510 = vsub.f32 1.0, %v492
        %v511 = vmul.f32 %v509, %v505
        %v512 = vmul.f32 %v510, %v506
        %v513 = vadd.f32 %v507, %v511
        %v514 = vadd.f32 %v508, %v512
        %v515 = vsub.f32 0.0, %v513
        %v516 = vsub.f32 0.0, %v514
        %vm517 = vcmp.ne.s32.totalorder %v224, 255
        %vm518 = vcmp.ne.s32.totalorder %v225, 255
        %vm519 = vmand %vm240, %vm517
        %vm520 = vmand %vm241, %vm518
        %s521 = sld [smem:[#allocation3]]
        %p522 = scmp.gt.s32.totalorder %s521, 1
        %s523 = scalar_select %p522, %s521, 1
        %s524 = scvt.s32.f32 %s523
        %v525 = vstv %s524
        %v526 = vrcp.pop %v525
        %s527 = vtos %v526
        %v528 = vsel %vm519, %v515, 0.0
        %v529 = vsel %vm520, %v516, 0.0
        %v530 = vadd.f32 %v528, %v529
        %531 = vadd.xlane.f32.xlu0 %v530
        %v532 = vpop.xlane.xlu0 %531
        %v533 = vrot.slane %v532, 4
        %v534 = vadd.f32 %v532, %v533
        %v535 = vrot.slane %v534, 2
        %v536 = vadd.f32 %v534, %v535
        %v537 = vrot.slane %v536, 1
        %v538 = vadd.f32 %v536, %v537
        %s539 = vtos %v538
        %s540 = smul.f32 %s539, %s527
        %v541 = vstv %s540
        %542 = vst [vmem:[%s219] sm:$0xff] %v541
        %s543 = sand.u32 %s99, 1
        %s544 = scalar_lea.sflag [#allocation6], %s543
        %s545 = sand.u32 %s99, 1
        %s546 = smul.addr %s545, 8
        %s547 = scalar_lea.vmem [#allocation10], %s546
        // Predicated region
        $region45: #{tpu_custom_call.1} parent=31 // pred_check
          %p548 = pneg %p109
        $region46: #{tpu_custom_call.1} parent=31 // pred_check_branch
          %550 = sbr.rel (%p548) target = $region48
        $region47: #{tpu_custom_call.1} parent=31 // pred_region
          %s552 = ssub.s32 128, 128
          %553 = vsyncadd %s544, %s552
          %s554 = smul.addr %s23, 128
          %s555 = scalar_lea.hbm %s4, %s554
          %s557 = sshll.u32 %s547, 4
          %s558 = int_to_ptr.vmem [resolvable:$true] %s557
          %560 = dma.vmem_to_hbm [thread:$0]  %s558, 128, %s555, %s544
        $region48: #{tpu_custom_call.1} parent=31 // pred_fallthru
          _
      $region32: #{tpu_custom_call.1} parent=5 // pred_fallthru
        _
      %p561 = scmp.le.s32.totalorder 2, %s18
      // Predicated region
      $region49: #{tpu_custom_call.1} parent=5 // pred_check
        %p562 = pneg %p561
      $region50: #{tpu_custom_call.1} parent=5 // pred_check_branch
        %564 = sbr.rel (%p562) target = $region52
      $region51: #{tpu_custom_call.1} parent=5 // pred_region
        %s565 = ssub.s32 %s18, 2
        // Predicated region
        $region53: #{tpu_custom_call.1} parent=51 // pred_check
          %p566 = pneg %p115
        $region54: #{tpu_custom_call.1} parent=51 // pred_check_branch
          %568 = sbr.rel (%p566) target = $region56
        $region55: #{tpu_custom_call.1} parent=51 // pred_region
          %s569 = sand.u32 %s100, 1
          %s570 = scalar_lea.sflag [#allocation6], %s569
          %s571 = sand.u32 %s100, 1
          %s572 = smul.addr %s571, 8
          %s573 = scalar_lea.vmem [#allocation10], %s572
          %574 = dma.done %s570, 128
        $region56: #{tpu_custom_call.1} parent=51 // pred_fallthru
          _
      $region52: #{tpu_custom_call.1} parent=5 // pred_fallthru
        _
    $region6: #{tpu_custom_call.1} parent=1 // loop_footer
      %s22 = sadd.s32 1, %s18
    $region7: #{tpu_custom_call.1} parent=1 // loop_footer_branch
      %17 = sbr.rel target = $region3
    $region8: #{tpu_custom_call.1} parent=1 // loop_exit
      _
    %575 = vsyncpa [#allocation5], 1
    %s576 = scalar_lea.sflag [#allocation5], 1
    %577 = vsyncpa %s576, 1
    %578 = vsyncpa [#allocation8], 1
    %579 = vsyncpa [#allocation6], 1
    %s580 = scalar_lea.sflag [#allocation6], 1
    %581 = vsyncpa %s580, 1

</llo_original>
